<compile_context>
chip_gen: v5e
topology: v5e:2x2
jax: 0.10.0
libtpu: 0.0.40
codegen_flags: <defaults>
</compile_context>

<pallas_src>
import jax
import jax.numpy as jnp
from jax.experimental import pallas as pl
from jax.experimental.pallas import tpu as pltpu


def _leaky_relu(x, slope=0.2):
    return jnp.where(x >= 0, x, slope * x)


def compress_kernel(x_ref,
                    w1_ref, b1_ref,
                    w2_ref, b2_ref,
                    w3_ref, b3_ref,
                    w4_ref, b4_ref,
                    o_ref):
    # x arrives in its native dtype (f32); cast to bf16 here on the VPU so the
    # cast is hidden under the x DMA instead of being a separate XLA pass.
    x = x_ref[...].astype(jnp.bfloat16)

    # Layer 1: Linear(F*64 -> F) + LeakyReLU(0.2)   [Dropout = identity, eval]
    # bf16 x bf16 MXU matmul with f32 accumulation; activations stay f32.
    h = jnp.dot(x, w1_ref[...], preferred_element_type=jnp.float32)
    h = _leaky_relu(h + b1_ref[...])

    # Layer 2: Linear(F -> F) + LeakyReLU(0.2)
    h = jnp.dot(h.astype(jnp.bfloat16), w2_ref[...],
                preferred_element_type=jnp.float32)
    h = _leaky_relu(h + b2_ref[...])

    # Layer 3: Linear(F -> F//2) + LeakyReLU(0.2)
    h = jnp.dot(h.astype(jnp.bfloat16), w3_ref[...],
                preferred_element_type=jnp.float32)
    h = _leaky_relu(h + b3_ref[...])

    # Layer 4: Linear(F//2 -> 1) + Sigmoid.  A 1-wide MXU matmul would use
    # 1/128 of the lanes and still pay the result-FIFO round trip, so do it
    # on the VPU + lane reduction.  w4 is stored as a (1, F//2) row vector.
    w4 = w4_ref[...].astype(jnp.float32)
    logit = jnp.sum(h * w4, axis=-1, keepdims=True) + b4_ref[...]

    # sigmoid(z) = 1 / (1 + exp(-z)); exact reciprocal (EUP slot is idle).
    o_ref[...] = pl.reciprocal(1.0 + jnp.exp(-logit),
                               approx=False).astype(o_ref.dtype)


def compress_forward(x, params, *, tile_b=1024):
    """x: (B, F*64) float; params from init_params.  Returns (B, 1) f32."""
    B, in_dim = x.shape
    w1, b1 = params["w1"], params["b1"]
    w2, b2 = params["w2"], params["b2"]
    w3, b3 = params["w3"], params["b3"]
    w4, b4 = params["w4"], params["b4"]
    feat = w1.shape[1]

    # Batch tile: largest multiple of 8 up to tile_b (sublane rule).  x is
    # passed untouched (no cast, no pad); a ragged last tile is handled by
    # Pallas' masked boundary blocks (rows are computed independently).
    tb = min(tile_b, max(B, 8))
    tb = (tb + 7) // 8 * 8
    nt = pl.cdiv(B, tb)
    if nt > 1 and nt % 2 == 1:
        # v7x has 2 TensorCores sharing the "parallel" batch axis: prefer an
        # even tile count for a balanced split (harmless on v5e/v6e).
        tb = max(8, (pl.cdiv(B, nt + 1) + 7) // 8 * 8)
        nt = pl.cdiv(B, tb)
    grid = (nt,)

    # Weights / biases: constant index_map -> fetched once, VMEM-resident.
    def resident(a):
        return pl.BlockSpec(a.shape, lambda i: (0,) * a.ndim)

    flops = 2 * B * (in_dim * feat + feat * feat
                     + feat * (feat // 2) + (feat // 2))
    bytes_accessed = (B * in_dim * x.dtype.itemsize          # x, native dtype
                      + sum(int(p.size) * p.dtype.itemsize
                            for p in params.values())
                      + B * 4)                                # f32 output

    out = pl.pallas_call(
        compress_kernel,
        out_shape=jax.ShapeDtypeStruct((B, 1), jnp.float32),
        grid=grid,
        in_specs=[pl.BlockSpec((tb, in_dim), lambda i: (i, 0)),
                  resident(w1), resident(b1),
                  resident(w2), resident(b2),
                  resident(w3), resident(b3),
                  resident(w4), resident(b4)],
        out_specs=pl.BlockSpec((tb, 1), lambda i: (i, 0)),
        compiler_params=pltpu.CompilerParams(
            dimension_semantics=("parallel",),
            # 1024-row f32 x tiles double-buffer to 16 MiB, which exceeds
            # v5e's 16 MiB default scoped-VMEM limit; 32 MiB covers all gens
            # (v7x physical VMEM is 64 MiB).
            vmem_limit_bytes=32 << 20),
        cost_estimate=pl.CostEstimate(
            flops=flops,
            transcendentals=B,
            bytes_accessed=bytes_accessed),
    )(x, w1, b1, w2, b2, w3, b3, w4, b4)

    return out


def init_params(key, feat):
    """Deterministic init matching PyTorch nn.Linear default ranges.

    Weights stored (in, out) in bf16 (w4 as a (1, F//2) row vector for the
    VPU-reduce head); biases stored (1, out) in f32.
    """
    in_dim = feat * 4 ** 3
    dims = [(in_dim, feat), (feat, feat), (feat, feat // 2), (feat // 2, 1)]
    params = {}
    for i, (din, dout) in enumerate(dims, start=1):
        key, kw, kb = jax.random.split(key, 3)
        bound = 1.0 / (din ** 0.5)
        w = jax.random.uniform(kw, (din, dout), jnp.float32, -bound, bound)
        b = jax.random.uniform(kb, (1, dout), jnp.float32, -bound, bound)
        if i == 4:
            w = w.T  # (1, F//2): row layout for the lane-reduce head
        params[f"w{i}"] = w.astype(jnp.bfloat16)
        params[f"b{i}"] = b
    return params


def compress_reference(x, params):
    """Pure-JAX reference mirroring the kernel's bf16-operand / f32-acc math."""
    h = jnp.dot(x.astype(jnp.bfloat16), params["w1"],
                preferred_element_type=jnp.float32)
    h = _leaky_relu(h + params["b1"])
    h = jnp.dot(h.astype(jnp.bfloat16), params["w2"],
                preferred_element_type=jnp.float32)
    h = _leaky_relu(h + params["b2"])
    h = jnp.dot(h.astype(jnp.bfloat16), params["w3"],
                preferred_element_type=jnp.float32)
    h = _leaky_relu(h + params["b3"])
    w4 = params["w4"].astype(jnp.float32)
    logit = jnp.sum(h * w4, axis=-1, keepdims=True) + params["b4"]
    return jax.nn.sigmoid(logit)


if __name__ == "__main__":
    key = jax.random.PRNGKey(0)

    # num_features[3] = 32  ->  input dim = 32 * 4**3 = 2048
    FEAT = 32
    BATCH = 8

    kx, kp = jax.random.split(key)
    x = jax.random.normal(kx, (BATCH, FEAT * 4 ** 3), jnp.float32)
    params = init_params(kp, FEAT)

    out = compress_forward(x, params)
    out = jax.block_until_ready(out)

    assert out.shape == (BATCH, 1)
    ref = compress_reference(x, params)
    assert bool(jnp.allclose(out, ref, atol=2e-2, rtol=2e-2)), (
        "kernel output mismatch vs reference: "
        f"max abs diff = {float(jnp.max(jnp.abs(out - ref)))}")
    print("KERNEL_OK")
</pallas_src>

<mosaic_0001>
module attributes {stable_mosaic.version = 11 : i64} {
  func.func @compress_kernel(%arg0: i32, %arg1: memref<8x2048xf32, #tpu.memory_space<vmem>>, %arg2: memref<2048x32xbf16, #tpu.memory_space<vmem>>, %arg3: memref<1x32xf32, #tpu.memory_space<vmem>>, %arg4: memref<32x32xbf16, #tpu.memory_space<vmem>>, %arg5: memref<1x32xf32, #tpu.memory_space<vmem>>, %arg6: memref<32x16xbf16, #tpu.memory_space<vmem>>, %arg7: memref<1x16xf32, #tpu.memory_space<vmem>>, %arg8: memref<1x16xbf16, #tpu.memory_space<vmem>>, %arg9: memref<1x1xf32, #tpu.memory_space<vmem>>, %arg10: memref<8x1xf32, #tpu.memory_space<vmem>>) attributes {dimension_semantics = [#tpu.dimension_semantics<parallel>], iteration_bounds = array<i64: 1>, scalar_prefetch = 0 : i64, scratch_operands = 0 : i64, tpu.core_type = #tpu.core_type<tc>, window_params = [{transform_indices = @transform_0, window_bounds = array<i64: 8, 2048>}, {pipeline_mode = #tpu.pipeline_mode<synchronous>, transform_indices = @transform_1, window_bounds = array<i64: 2048, 32>}, {pipeline_mode = #tpu.pipeline_mode<synchronous>, transform_indices = @transform_2, window_bounds = array<i64: 1, 32>}, {pipeline_mode = #tpu.pipeline_mode<synchronous>, transform_indices = @transform_3, window_bounds = array<i64: 32, 32>}, {pipeline_mode = #tpu.pipeline_mode<synchronous>, transform_indices = @transform_4, window_bounds = array<i64: 1, 32>}, {pipeline_mode = #tpu.pipeline_mode<synchronous>, transform_indices = @transform_5, window_bounds = array<i64: 32, 16>}, {pipeline_mode = #tpu.pipeline_mode<synchronous>, transform_indices = @transform_6, window_bounds = array<i64: 1, 16>}, {pipeline_mode = #tpu.pipeline_mode<synchronous>, transform_indices = @transform_7, window_bounds = array<i64: 1, 16>}, {pipeline_mode = #tpu.pipeline_mode<synchronous>, transform_indices = @transform_8, window_bounds = array<i64: 1, 1>}, {transform_indices = @transform_9, window_bounds = array<i64: 8, 1>}]} {
    %c0 = arith.constant 0 : index
    %c0_0 = arith.constant 0 : index
    %0 = vector.load %arg1[%c0, %c0_0] : memref<8x2048xf32, #tpu.memory_space<vmem>>, vector<8x2048xf32>
    %1 = arith.truncf %0 : vector<8x2048xf32> to vector<8x2048xbf16>
    %c0_1 = arith.constant 0 : index
    %c0_2 = arith.constant 0 : index
    %2 = vector.load %arg2[%c0_1, %c0_2] : memref<2048x32xbf16, #tpu.memory_space<vmem>>, vector<2048x32xbf16>
    %cst = arith.constant dense<0.000000e+00> : vector<8x32xf32>
    %3 = tpu.matmul %1, %2, %cst {dimension_numbers = #tpu.dot_dimension_numbers<[1], [0], [0], [1], [0, 0, 1, 1], [], []>} : vector<8x2048xbf16>, vector<2048x32xbf16>, vector<8x32xf32> -> vector<8x32xf32>
    %c0_3 = arith.constant 0 : index
    %c0_4 = arith.constant 0 : index
    %4 = vector.load %arg3[%c0_3, %c0_4] : memref<1x32xf32, #tpu.memory_space<vmem>>, vector<1x32xf32>
    %5 = vector.broadcast %4 : vector<1x32xf32> to vector<8x32xf32>
    %6 = arith.addf %3, %5 : vector<8x32xf32>
    %cst_5 = arith.constant 0.000000e+00 : f32
    %7 = vector.broadcast %cst_5 : f32 to vector<8x32xf32>
    %8 = arith.cmpf oge, %6, %7 : vector<8x32xf32>
    %cst_6 = arith.constant 2.000000e-01 : f32
    %9 = vector.broadcast %cst_6 : f32 to vector<8x32xf32>
    %10 = arith.mulf %9, %6 : vector<8x32xf32>
    %11 = arith.select %8, %6, %10 : vector<8x32xi1>, vector<8x32xf32>
    %12 = arith.truncf %11 : vector<8x32xf32> to vector<8x32xbf16>
    %c0_7 = arith.constant 0 : index
    %c0_8 = arith.constant 0 : index
    %13 = vector.load %arg4[%c0_7, %c0_8] : memref<32x32xbf16, #tpu.memory_space<vmem>>, vector<32x32xbf16>
    %cst_9 = arith.constant dense<0.000000e+00> : vector<8x32xf32>
    %14 = tpu.matmul %12, %13, %cst_9 {dimension_numbers = #tpu.dot_dimension_numbers<[1], [0], [0], [1], [0, 0, 1, 1], [], []>} : vector<8x32xbf16>, vector<32x32xbf16>, vector<8x32xf32> -> vector<8x32xf32>
    %c0_10 = arith.constant 0 : index
    %c0_11 = arith.constant 0 : index
    %15 = vector.load %arg5[%c0_10, %c0_11] : memref<1x32xf32, #tpu.memory_space<vmem>>, vector<1x32xf32>
    %16 = vector.broadcast %15 : vector<1x32xf32> to vector<8x32xf32>
    %17 = arith.addf %14, %16 : vector<8x32xf32>
    %cst_12 = arith.constant 0.000000e+00 : f32
    %18 = vector.broadcast %cst_12 : f32 to vector<8x32xf32>
    %19 = arith.cmpf oge, %17, %18 : vector<8x32xf32>
    %cst_13 = arith.constant 2.000000e-01 : f32
    %20 = vector.broadcast %cst_13 : f32 to vector<8x32xf32>
    %21 = arith.mulf %20, %17 : vector<8x32xf32>
    %22 = arith.select %19, %17, %21 : vector<8x32xi1>, vector<8x32xf32>
    %23 = arith.truncf %22 : vector<8x32xf32> to vector<8x32xbf16>
    %c0_14 = arith.constant 0 : index
    %c0_15 = arith.constant 0 : index
    %24 = vector.load %arg6[%c0_14, %c0_15] : memref<32x16xbf16, #tpu.memory_space<vmem>>, vector<32x16xbf16>
    %cst_16 = arith.constant dense<0.000000e+00> : vector<8x16xf32>
    %25 = tpu.matmul %23, %24, %cst_16 {dimension_numbers = #tpu.dot_dimension_numbers<[1], [0], [0], [1], [0, 0, 1, 1], [], []>} : vector<8x32xbf16>, vector<32x16xbf16>, vector<8x16xf32> -> vector<8x16xf32>
    %c0_17 = arith.constant 0 : index
    %c0_18 = arith.constant 0 : index
    %26 = vector.load %arg7[%c0_17, %c0_18] : memref<1x16xf32, #tpu.memory_space<vmem>>, vector<1x16xf32>
    %27 = vector.broadcast %26 : vector<1x16xf32> to vector<8x16xf32>
    %28 = arith.addf %25, %27 : vector<8x16xf32>
    %cst_19 = arith.constant 0.000000e+00 : f32
    %29 = vector.broadcast %cst_19 : f32 to vector<8x16xf32>
    %30 = arith.cmpf oge, %28, %29 : vector<8x16xf32>
    %cst_20 = arith.constant 2.000000e-01 : f32
    %31 = vector.broadcast %cst_20 : f32 to vector<8x16xf32>
    %32 = arith.mulf %31, %28 : vector<8x16xf32>
    %33 = arith.select %30, %28, %32 : vector<8x16xi1>, vector<8x16xf32>
    %c0_21 = arith.constant 0 : index
    %c0_22 = arith.constant 0 : index
    %34 = vector.load %arg8[%c0_21, %c0_22] : memref<1x16xbf16, #tpu.memory_space<vmem>>, vector<1x16xbf16>
    %35 = arith.extf %34 : vector<1x16xbf16> to vector<1x16xf32>
    %36 = vector.broadcast %35 : vector<1x16xf32> to vector<8x16xf32>
    %37 = arith.mulf %33, %36 : vector<8x16xf32>
    %cst_23 = arith.constant dense<0.000000e+00> : vector<8xf32>
    %38 = vector.multi_reduction <add>, %37, %cst_23 [1] : vector<8x16xf32> to vector<8xf32>
    %39 = vector.shape_cast %38 : vector<8xf32> to vector<8x1xf32>
    %c0_24 = arith.constant 0 : index
    %c0_25 = arith.constant 0 : index
    %40 = vector.load %arg9[%c0_24, %c0_25] : memref<1x1xf32, #tpu.memory_space<vmem>>, vector<1x1xf32>
    %41 = vector.broadcast %40 : vector<1x1xf32> to vector<8x1xf32>
    %42 = arith.addf %39, %41 : vector<8x1xf32>
    %cst_26 = arith.constant 0.000000e+00 : f32
    %43 = vector.broadcast %cst_26 : f32 to vector<8x1xf32>
    %44 = arith.subf %43, %42 : vector<8x1xf32>
    %45 = math.exp %44 : vector<8x1xf32>
    %cst_27 = arith.constant 1.000000e+00 : f32
    %46 = vector.broadcast %cst_27 : f32 to vector<8x1xf32>
    %47 = arith.addf %46, %45 : vector<8x1xf32>
    %48 = tpu.reciprocal %47 : vector<8x1xf32> -> vector<8x1xf32>
    %c0_28 = arith.constant 0 : index
    %c0_29 = arith.constant 0 : index
    %49 = vector.load %arg10[%c0_28, %c0_29] : memref<8x1xf32, #tpu.memory_space<vmem>>, vector<8x1xf32>
    tpu.vector_store %arg10[%c0_28, %c0_29], %48 {strides = array<i32>} : memref<8x1xf32, #tpu.memory_space<vmem>>, vector<8x1xf32>,
    return
  }
  func.func @transform_0(%arg0: i32) -> (i32, i32) {
    %c0_i32 = arith.constant 0 : i32
    %c0_i32_0 = arith.constant 0 : i32
    return %arg0, %c0_i32 : i32, i32
  }
  func.func @transform_1(%arg0: i32) -> (i32, i32) {
    %c0_i32 = arith.constant 0 : i32
    %c0_i32_0 = arith.constant 0 : i32
    %c0_i32_1 = arith.constant 0 : i32
    return %c0_i32, %c0_i32_0 : i32, i32
  }
  func.func @transform_2(%arg0: i32) -> (i32, i32) {
    %c0_i32 = arith.constant 0 : i32
    %c0_i32_0 = arith.constant 0 : i32
    %c0_i32_1 = arith.constant 0 : i32
    return %c0_i32, %c0_i32_0 : i32, i32
  }
  func.func @transform_3(%arg0: i32) -> (i32, i32) {
    %c0_i32 = arith.constant 0 : i32
    %c0_i32_0 = arith.constant 0 : i32
    %c0_i32_1 = arith.constant 0 : i32
    return %c0_i32, %c0_i32_0 : i32, i32
  }
  func.func @transform_4(%arg0: i32) -> (i32, i32) {
    %c0_i32 = arith.constant 0 : i32
    %c0_i32_0 = arith.constant 0 : i32
    %c0_i32_1 = arith.constant 0 : i32
    return %c0_i32, %c0_i32_0 : i32, i32
  }
  func.func @transform_5(%arg0: i32) -> (i32, i32) {
    %c0_i32 = arith.constant 0 : i32
    %c0_i32_0 = arith.constant 0 : i32
    %c0_i32_1 = arith.constant 0 : i32
    return %c0_i32, %c0_i32_0 : i32, i32
  }
  func.func @transform_6(%arg0: i32) -> (i32, i32) {
    %c0_i32 = arith.constant 0 : i32
    %c0_i32_0 = arith.constant 0 : i32
    %c0_i32_1 = arith.constant 0 : i32
    return %c0_i32, %c0_i32_0 : i32, i32
  }
  func.func @transform_7(%arg0: i32) -> (i32, i32) {
    %c0_i32 = arith.constant 0 : i32
    %c0_i32_0 = arith.constant 0 : i32
    %c0_i32_1 = arith.constant 0 : i32
    return %c0_i32, %c0_i32_0 : i32, i32
  }
  func.func @transform_8(%arg0: i32) -> (i32, i32) {
    %c0_i32 = arith.constant 0 : i32
    %c0_i32_0 = arith.constant 0 : i32
    %c0_i32_1 = arith.constant 0 : i32
    return %c0_i32, %c0_i32_0 : i32, i32
  }
  func.func @transform_9(%arg0: i32) -> (i32, i32) {
    %c0_i32 = arith.constant 0 : i32
    %c0_i32_0 = arith.constant 0 : i32
    return %arg0, %c0_i32 : i32, i32
  }
}

</mosaic_0001>

<llo_original>
// kernel: tpu_custom_call.1
$region0: #{tpu_custom_call.1}
  #allocation0 [shape = 'u32[]', space=smem, size = 0x4, offset = 0x4, fixed_abs, tag = 'smem constant byte address 0x4 - core index']
  #allocation1 [shape = 'u32[72,128]{1,0:T(1,128)}', space=vmem, size = 0x9000, scoped, tag = 'internal scratch']
  #allocation2 [shape = 'f32[1,1]{1,0:T(1,128)S(1)}', space=vmem, size = 0x200, scoped, tag = 'scoped memory for tpu_custom_call.1']
  %s0 = inlined_call_operand.vmem [shape: f32[8,2048], index: 0, kind: input, shape index: {}]
  %s1 = inlined_call_operand.vmem [shape: bf16[2048,32], index: 1, kind: input, shape index: {}]
  %s2 = inlined_call_operand.vmem [shape: f32[1,32], index: 2, kind: input, shape index: {}]
  %s3 = inlined_call_operand.vmem [shape: bf16[32,32], index: 3, kind: input, shape index: {}]
  %s4 = inlined_call_operand.vmem [shape: f32[1,32], index: 4, kind: input, shape index: {}]
  %s5 = inlined_call_operand.vmem [shape: bf16[32,16], index: 5, kind: input, shape index: {}]
  %s6 = inlined_call_operand.vmem [shape: f32[1,16], index: 6, kind: input, shape index: {}]
  %s7 = inlined_call_operand.vmem [shape: bf16[1,16], index: 7, kind: input, shape index: {}]
  %s8 = inlined_call_operand.<no memory space> [shape: f32[1,1], index: 8, kind: input, shape index: {}]
  %s9 = inlined_call_operand.vmem [shape: f32[8,1], index: 9, kind: output, shape index: {}]
  %s10 = sld [smem:[#allocation0]]
  $region46: #{tpu_custom_call.1} parent=0
    _
  %s12 = ssub.s32 1, %s10
  %s13 = scalar_select 0, %s12, %s10
  %v14 = vstv %s8
  %15 = vst [vmem:[#allocation2] sm:$0x1] %v14
  // Predicated region
  $region2: #{tpu_custom_call.1} parent=0 // pred_check
    _
  $region3: #{tpu_custom_call.1} parent=0 // pred_check_branch
    %17 = sbr.rel (0) target = $region5
  $region4: #{tpu_custom_call.1} parent=0 // pred_region
    _
  $region5: #{tpu_custom_call.1} parent=0 // pred_fallthru
    _
  // Predicated region
  $region6: #{tpu_custom_call.1} parent=0 // pred_check
    _
  $region7: #{tpu_custom_call.1} parent=0 // pred_check_branch
    %19 = sbr.rel (0) target = $region9
  $region8: #{tpu_custom_call.1} parent=0 // pred_region
    _
  $region9: #{tpu_custom_call.1} parent=0 // pred_fallthru
    _
  // Predicated region
  $region10: #{tpu_custom_call.1} parent=0 // pred_check
    _
  $region11: #{tpu_custom_call.1} parent=0 // pred_check_branch
    %21 = sbr.rel (0) target = $region13
  $region12: #{tpu_custom_call.1} parent=0 // pred_region
    _
  $region13: #{tpu_custom_call.1} parent=0 // pred_fallthru
    _
  // Predicated region
  $region14: #{tpu_custom_call.1} parent=0 // pred_check
    _
  $region15: #{tpu_custom_call.1} parent=0 // pred_check_branch
    %23 = sbr.rel (0) target = $region17
  $region16: #{tpu_custom_call.1} parent=0 // pred_region
    _
  $region17: #{tpu_custom_call.1} parent=0 // pred_fallthru
    _
  // Predicated region
  $region18: #{tpu_custom_call.1} parent=0 // pred_check
    _
  $region19: #{tpu_custom_call.1} parent=0 // pred_check_branch
    %25 = sbr.rel (0) target = $region21
  $region20: #{tpu_custom_call.1} parent=0 // pred_region
    _
  $region21: #{tpu_custom_call.1} parent=0 // pred_fallthru
    _
  // Predicated region
  $region22: #{tpu_custom_call.1} parent=0 // pred_check
    _
  $region23: #{tpu_custom_call.1} parent=0 // pred_check_branch
    %27 = sbr.rel (0) target = $region25
  $region24: #{tpu_custom_call.1} parent=0 // pred_region
    _
  $region25: #{tpu_custom_call.1} parent=0 // pred_fallthru
    _
  // Predicated region
  $region26: #{tpu_custom_call.1} parent=0 // pred_check
    _
  $region27: #{tpu_custom_call.1} parent=0 // pred_check_branch
    %29 = sbr.rel (0) target = $region29
  $region28: #{tpu_custom_call.1} parent=0 // pred_region
    _
  $region29: #{tpu_custom_call.1} parent=0 // pred_fallthru
    _
  // Predicated region
  $region30: #{tpu_custom_call.1} parent=0 // pred_check
    _
  $region31: #{tpu_custom_call.1} parent=0 // pred_check_branch
    %31 = sbr.rel (0) target = $region33
  $region32: #{tpu_custom_call.1} parent=0 // pred_region
    _
  $region33: #{tpu_custom_call.1} parent=0 // pred_fallthru
    _
  // Predicated region
  $region34: #{tpu_custom_call.1} parent=0 // pred_check
    _
  $region35: #{tpu_custom_call.1} parent=0 // pred_check_branch
    %33 = sbr.rel (0) target = $region37
  $region36: #{tpu_custom_call.1} parent=0 // pred_region
    _
  $region37: #{tpu_custom_call.1} parent=0 // pred_fallthru
    _
  %v35 = vld [vmem:[%s0] sm:$0xff]
  %v36 = vld [vmem:[%s0 + $0x8] sm:$0xff]
  %v37 = vld [vmem:[%s0 + $0x10] sm:$0xff]
  %v38 = vld [vmem:[%s0 + $0x18] sm:$0xff]
  %v39 = vld [vmem:[%s0 + $0x20] sm:$0xff]
  %v40 = vld [vmem:[%s0 + $0x28] sm:$0xff]
  %v41 = vld [vmem:[%s0 + $0x30] sm:$0xff]
  %v42 = vld [vmem:[%s0 + $0x38] sm:$0xff]
  %v43 = vld [vmem:[%s0 + $0x40] sm:$0xff]
  %v44 = vld [vmem:[%s0 + $0x48] sm:$0xff]
  %v45 = vld [vmem:[%s0 + $0x50] sm:$0xff]
  %v46 = vld [vmem:[%s0 + $0x58] sm:$0xff]
  %v47 = vld [vmem:[%s0 + $0x60] sm:$0xff]
  %v48 = vld [vmem:[%s0 + $0x68] sm:$0xff]
  %v49 = vld [vmem:[%s0 + $0x70] sm:$0xff]
  %v50 = vld [vmem:[%s0 + $0x78] sm:$0xff]
  %v51 = vpack.c.bf16 %v35, %v35
  %v52 = vpack.c.bf16 %v36, %v36
  %v53 = vpack.c.bf16 %v37, %v37
  %v54 = vpack.c.bf16 %v38, %v38
  %v55 = vpack.c.bf16 %v39, %v39
  %v56 = vpack.c.bf16 %v40, %v40
  %v57 = vpack.c.bf16 %v41, %v41
  %v58 = vpack.c.bf16 %v42, %v42
  %v59 = vpack.c.bf16 %v43, %v43
  %v60 = vpack.c.bf16 %v44, %v44
  %v61 = vpack.c.bf16 %v45, %v45
  %v62 = vpack.c.bf16 %v46, %v46
  %v63 = vpack.c.bf16 %v47, %v47
  %v64 = vpack.c.bf16 %v48, %v48
  %v65 = vpack.c.bf16 %v49, %v49
  %v66 = vpack.c.bf16 %v50, %v50
  %v67 = vld [vmem:[%s1] sm:$0xf]
  %v68 = vld [vmem:[%s1 + $0x4] sm:$0xf]
  %v69 = vld [vmem:[%s1 + $0x8] sm:$0xf]
  %v70 = vld [vmem:[%s1 + $0xc] sm:$0xf]
  %v71 = vld [vmem:[%s1 + $0x10] sm:$0xf]
  %v72 = vld [vmem:[%s1 + $0x14] sm:$0xf]
  %v73 = vld [vmem:[%s1 + $0x18] sm:$0xf]
  %v74 = vld [vmem:[%s1 + $0x1c] sm:$0xf]
  %v75 = vld [vmem:[%s1 + $0x20] sm:$0xf]
  %v76 = vld [vmem:[%s1 + $0x24] sm:$0xf]
  %v77 = vld [vmem:[%s1 + $0x28] sm:$0xf]
  %v78 = vld [vmem:[%s1 + $0x2c] sm:$0xf]
  %v79 = vld [vmem:[%s1 + $0x30] sm:$0xf]
  %v80 = vld [vmem:[%s1 + $0x34] sm:$0xf]
  %v81 = vld [vmem:[%s1 + $0x38] sm:$0xf]
  %v82 = vld [vmem:[%s1 + $0x3c] sm:$0xf]
  %v83 = vld [vmem:[%s1 + $0x40] sm:$0xf]
  %v84 = vld [vmem:[%s1 + $0x44] sm:$0xf]
  %v85 = vld [vmem:[%s1 + $0x48] sm:$0xf]
  %v86 = vld [vmem:[%s1 + $0x4c] sm:$0xf]
  %v87 = vld [vmem:[%s1 + $0x50] sm:$0xf]
  %v88 = vld [vmem:[%s1 + $0x54] sm:$0xf]
  %v89 = vld [vmem:[%s1 + $0x58] sm:$0xf]
  %v90 = vld [vmem:[%s1 + $0x5c] sm:$0xf]
  %v91 = vld [vmem:[%s1 + $0x60] sm:$0xf]
  %v92 = vld [vmem:[%s1 + $0x64] sm:$0xf]
  %v93 = vld [vmem:[%s1 + $0x68] sm:$0xf]
  %v94 = vld [vmem:[%s1 + $0x6c] sm:$0xf]
  %v95 = vld [vmem:[%s1 + $0x70] sm:$0xf]
  %v96 = vld [vmem:[%s1 + $0x74] sm:$0xf]
  %v97 = vld [vmem:[%s1 + $0x78] sm:$0xf]
  %v98 = vld [vmem:[%s1 + $0x7c] sm:$0xf]
  %v99 = vld [vmem:[%s1 + $0x80] sm:$0xf]
  %v100 = vld [vmem:[%s1 + $0x84] sm:$0xf]
  %v101 = vld [vmem:[%s1 + $0x88] sm:$0xf]
  %v102 = vld [vmem:[%s1 + $0x8c] sm:$0xf]
  %v103 = vld [vmem:[%s1 + $0x90] sm:$0xf]
  %v104 = vld [vmem:[%s1 + $0x94] sm:$0xf]
  %v105 = vld [vmem:[%s1 + $0x98] sm:$0xf]
  %v106 = vld [vmem:[%s1 + $0x9c] sm:$0xf]
  %v107 = vld [vmem:[%s1 + $0xa0] sm:$0xf]
  %v108 = vld [vmem:[%s1 + $0xa4] sm:$0xf]
  %v109 = vld [vmem:[%s1 + $0xa8] sm:$0xf]
  %v110 = vld [vmem:[%s1 + $0xac] sm:$0xf]
  %v111 = vld [vmem:[%s1 + $0xb0] sm:$0xf]
  %v112 = vld [vmem:[%s1 + $0xb4] sm:$0xf]
  %v113 = vld [vmem:[%s1 + $0xb8] sm:$0xf]
  %v114 = vld [vmem:[%s1 + $0xbc] sm:$0xf]
  %v115 = vld [vmem:[%s1 + $0xc0] sm:$0xf]
  %v116 = vld [vmem:[%s1 + $0xc4] sm:$0xf]
  %v117 = vld [vmem:[%s1 + $0xc8] sm:$0xf]
  %v118 = vld [vmem:[%s1 + $0xcc] sm:$0xf]
  %v119 = vld [vmem:[%s1 + $0xd0] sm:$0xf]
  %v120 = vld [vmem:[%s1 + $0xd4] sm:$0xf]
  %v121 = vld [vmem:[%s1 + $0xd8] sm:$0xf]
  %v122 = vld [vmem:[%s1 + $0xdc] sm:$0xf]
  %v123 = vld [vmem:[%s1 + $0xe0] sm:$0xf]
  %v124 = vld [vmem:[%s1 + $0xe4] sm:$0xf]
  %v125 = vld [vmem:[%s1 + $0xe8] sm:$0xf]
  %v126 = vld [vmem:[%s1 + $0xec] sm:$0xf]
  %v127 = vld [vmem:[%s1 + $0xf0] sm:$0xf]
  %v128 = vld [vmem:[%s1 + $0xf4] sm:$0xf]
  %v129 = vld [vmem:[%s1 + $0xf8] sm:$0xf]
  %v130 = vld [vmem:[%s1 + $0xfc] sm:$0xf]
  %v131 = vld [vmem:[%s1 + $0x100] sm:$0xf]
  %v132 = vld [vmem:[%s1 + $0x104] sm:$0xf]
  %v133 = vld [vmem:[%s1 + $0x108] sm:$0xf]
  %v134 = vld [vmem:[%s1 + $0x10c] sm:$0xf]
  %v135 = vld [vmem:[%s1 + $0x110] sm:$0xf]
  %v136 = vld [vmem:[%s1 + $0x114] sm:$0xf]
  %v137 = vld [vmem:[%s1 + $0x118] sm:$0xf]
  %v138 = vld [vmem:[%s1 + $0x11c] sm:$0xf]
  %v139 = vld [vmem:[%s1 + $0x120] sm:$0xf]
  %v140 = vld [vmem:[%s1 + $0x124] sm:$0xf]
  %v141 = vld [vmem:[%s1 + $0x128] sm:$0xf]
  %v142 = vld [vmem:[%s1 + $0x12c] sm:$0xf]
  %v143 = vld [vmem:[%s1 + $0x130] sm:$0xf]
  %v144 = vld [vmem:[%s1 + $0x134] sm:$0xf]
  %v145 = vld [vmem:[%s1 + $0x138] sm:$0xf]
  %v146 = vld [vmem:[%s1 + $0x13c] sm:$0xf]
  %v147 = vld [vmem:[%s1 + $0x140] sm:$0xf]
  %v148 = vld [vmem:[%s1 + $0x144] sm:$0xf]
  %v149 = vld [vmem:[%s1 + $0x148] sm:$0xf]
  %v150 = vld [vmem:[%s1 + $0x14c] sm:$0xf]
  %v151 = vld [vmem:[%s1 + $0x150] sm:$0xf]
  %v152 = vld [vmem:[%s1 + $0x154] sm:$0xf]
  %v153 = vld [vmem:[%s1 + $0x158] sm:$0xf]
  %v154 = vld [vmem:[%s1 + $0x15c] sm:$0xf]
  %v155 = vld [vmem:[%s1 + $0x160] sm:$0xf]
  %v156 = vld [vmem:[%s1 + $0x164] sm:$0xf]
  %v157 = vld [vmem:[%s1 + $0x168] sm:$0xf]
  %v158 = vld [vmem:[%s1 + $0x16c] sm:$0xf]
  %v159 = vld [vmem:[%s1 + $0x170] sm:$0xf]
  %v160 = vld [vmem:[%s1 + $0x174] sm:$0xf]
  %v161 = vld [vmem:[%s1 + $0x178] sm:$0xf]
  %v162 = vld [vmem:[%s1 + $0x17c] sm:$0xf]
  %v163 = vld [vmem:[%s1 + $0x180] sm:$0xf]
  %v164 = vld [vmem:[%s1 + $0x184] sm:$0xf]
  %v165 = vld [vmem:[%s1 + $0x188] sm:$0xf]
  %v166 = vld [vmem:[%s1 + $0x18c] sm:$0xf]
  %v167 = vld [vmem:[%s1 + $0x190] sm:$0xf]
  %v168 = vld [vmem:[%s1 + $0x194] sm:$0xf]
  %v169 = vld [vmem:[%s1 + $0x198] sm:$0xf]
  %v170 = vld [vmem:[%s1 + $0x19c] sm:$0xf]
  %v171 = vld [vmem:[%s1 + $0x1a0] sm:$0xf]
  %v172 = vld [vmem:[%s1 + $0x1a4] sm:$0xf]
  %v173 = vld [vmem:[%s1 + $0x1a8] sm:$0xf]
  %v174 = vld [vmem:[%s1 + $0x1ac] sm:$0xf]
  %v175 = vld [vmem:[%s1 + $0x1b0] sm:$0xf]
  %v176 = vld [vmem:[%s1 + $0x1b4] sm:$0xf]
  %v177 = vld [vmem:[%s1 + $0x1b8] sm:$0xf]
  %v178 = vld [vmem:[%s1 + $0x1bc] sm:$0xf]
  %v179 = vld [vmem:[%s1 + $0x1c0] sm:$0xf]
  %v180 = vld [vmem:[%s1 + $0x1c4] sm:$0xf]
  %v181 = vld [vmem:[%s1 + $0x1c8] sm:$0xf]
  %v182 = vld [vmem:[%s1 + $0x1cc] sm:$0xf]
  %v183 = vld [vmem:[%s1 + $0x1d0] sm:$0xf]
  %v184 = vld [vmem:[%s1 + $0x1d4] sm:$0xf]
  %v185 = vld [vmem:[%s1 + $0x1d8] sm:$0xf]
  %v186 = vld [vmem:[%s1 + $0x1dc] sm:$0xf]
  %v187 = vld [vmem:[%s1 + $0x1e0] sm:$0xf]
  %v188 = vld [vmem:[%s1 + $0x1e4] sm:$0xf]
  %v189 = vld [vmem:[%s1 + $0x1e8] sm:$0xf]
  %v190 = vld [vmem:[%s1 + $0x1ec] sm:$0xf]
  %v191 = vld [vmem:[%s1 + $0x1f0] sm:$0xf]
  %v192 = vld [vmem:[%s1 + $0x1f4] sm:$0xf]
  %v193 = vld [vmem:[%s1 + $0x1f8] sm:$0xf]
  %v194 = vld [vmem:[%s1 + $0x1fc] sm:$0xf]
  %v195 = vld [vmem:[%s1 + $0x200] sm:$0xf]
  %v196 = vld [vmem:[%s1 + $0x204] sm:$0xf]
  %v197 = vld [vmem:[%s1 + $0x208] sm:$0xf]
  %v198 = vld [vmem:[%s1 + $0x20c] sm:$0xf]
  %v199 = vld [vmem:[%s1 + $0x210] sm:$0xf]
  %v200 = vld [vmem:[%s1 + $0x214] sm:$0xf]
  %v201 = vld [vmem:[%s1 + $0x218] sm:$0xf]
  %v202 = vld [vmem:[%s1 + $0x21c] sm:$0xf]
  %v203 = vld [vmem:[%s1 + $0x220] sm:$0xf]
  %v204 = vld [vmem:[%s1 + $0x224] sm:$0xf]
  %v205 = vld [vmem:[%s1 + $0x228] sm:$0xf]
  %v206 = vld [vmem:[%s1 + $0x22c] sm:$0xf]
  %v207 = vld [vmem:[%s1 + $0x230] sm:$0xf]
  %v208 = vld [vmem:[%s1 + $0x234] sm:$0xf]
  %v209 = vld [vmem:[%s1 + $0x238] sm:$0xf]
  %v210 = vld [vmem:[%s1 + $0x23c] sm:$0xf]
  %v211 = vld [vmem:[%s1 + $0x240] sm:$0xf]
  %v212 = vld [vmem:[%s1 + $0x244] sm:$0xf]
  %v213 = vld [vmem:[%s1 + $0x248] sm:$0xf]
  %v214 = vld [vmem:[%s1 + $0x24c] sm:$0xf]
  %v215 = vld [vmem:[%s1 + $0x250] sm:$0xf]
  %v216 = vld [vmem:[%s1 + $0x254] sm:$0xf]
  %v217 = vld [vmem:[%s1 + $0x258] sm:$0xf]
  %v218 = vld [vmem:[%s1 + $0x25c] sm:$0xf]
  %v219 = vld [vmem:[%s1 + $0x260] sm:$0xf]
  %v220 = vld [vmem:[%s1 + $0x264] sm:$0xf]
  %v221 = vld [vmem:[%s1 + $0x268] sm:$0xf]
  %v222 = vld [vmem:[%s1 + $0x26c] sm:$0xf]
  %v223 = vld [vmem:[%s1 + $0x270] sm:$0xf]
  %v224 = vld [vmem:[%s1 + $0x274] sm:$0xf]
  %v225 = vld [vmem:[%s1 + $0x278] sm:$0xf]
  %v226 = vld [vmem:[%s1 + $0x27c] sm:$0xf]
  %v227 = vld [vmem:[%s1 + $0x280] sm:$0xf]
  %v228 = vld [vmem:[%s1 + $0x284] sm:$0xf]
  %v229 = vld [vmem:[%s1 + $0x288] sm:$0xf]
  %v230 = vld [vmem:[%s1 + $0x28c] sm:$0xf]
  %v231 = vld [vmem:[%s1 + $0x290] sm:$0xf]
  %v232 = vld [vmem:[%s1 + $0x294] sm:$0xf]
  %v233 = vld [vmem:[%s1 + $0x298] sm:$0xf]
  %v234 = vld [vmem:[%s1 + $0x29c] sm:$0xf]
  %v235 = vld [vmem:[%s1 + $0x2a0] sm:$0xf]
  %v236 = vld [vmem:[%s1 + $0x2a4] sm:$0xf]
  %v237 = vld [vmem:[%s1 + $0x2a8] sm:$0xf]
  %v238 = vld [vmem:[%s1 + $0x2ac] sm:$0xf]
  %v239 = vld [vmem:[%s1 + $0x2b0] sm:$0xf]
  %v240 = vld [vmem:[%s1 + $0x2b4] sm:$0xf]
  %v241 = vld [vmem:[%s1 + $0x2b8] sm:$0xf]
  %v242 = vld [vmem:[%s1 + $0x2bc] sm:$0xf]
  %v243 = vld [vmem:[%s1 + $0x2c0] sm:$0xf]
  %v244 = vld [vmem:[%s1 + $0x2c4] sm:$0xf]
  %v245 = vld [vmem:[%s1 + $0x2c8] sm:$0xf]
  %v246 = vld [vmem:[%s1 + $0x2cc] sm:$0xf]
  %v247 = vld [vmem:[%s1 + $0x2d0] sm:$0xf]
  %v248 = vld [vmem:[%s1 + $0x2d4] sm:$0xf]
  %v249 = vld [vmem:[%s1 + $0x2d8] sm:$0xf]
  %v250 = vld [vmem:[%s1 + $0x2dc] sm:$0xf]
  %v251 = vld [vmem:[%s1 + $0x2e0] sm:$0xf]
  %v252 = vld [vmem:[%s1 + $0x2e4] sm:$0xf]
  %v253 = vld [vmem:[%s1 + $0x2e8] sm:$0xf]
  %v254 = vld [vmem:[%s1 + $0x2ec] sm:$0xf]
  %v255 = vld [vmem:[%s1 + $0x2f0] sm:$0xf]
  %v256 = vld [vmem:[%s1 + $0x2f4] sm:$0xf]
  %v257 = vld [vmem:[%s1 + $0x2f8] sm:$0xf]
  %v258 = vld [vmem:[%s1 + $0x2fc] sm:$0xf]
  %v259 = vld [vmem:[%s1 + $0x300] sm:$0xf]
  %v260 = vld [vmem:[%s1 + $0x304] sm:$0xf]
  %v261 = vld [vmem:[%s1 + $0x308] sm:$0xf]
  %v262 = vld [vmem:[%s1 + $0x30c] sm:$0xf]
  %v263 = vld [vmem:[%s1 + $0x310] sm:$0xf]
  %v264 = vld [vmem:[%s1 + $0x314] sm:$0xf]
  %v265 = vld [vmem:[%s1 + $0x318] sm:$0xf]
  %v266 = vld [vmem:[%s1 + $0x31c] sm:$0xf]
  %v267 = vld [vmem:[%s1 + $0x320] sm:$0xf]
  %v268 = vld [vmem:[%s1 + $0x324] sm:$0xf]
  %v269 = vld [vmem:[%s1 + $0x328] sm:$0xf]
  %v270 = vld [vmem:[%s1 + $0x32c] sm:$0xf]
  %v271 = vld [vmem:[%s1 + $0x330] sm:$0xf]
  %v272 = vld [vmem:[%s1 + $0x334] sm:$0xf]
  %v273 = vld [vmem:[%s1 + $0x338] sm:$0xf]
  %v274 = vld [vmem:[%s1 + $0x33c] sm:$0xf]
  %v275 = vld [vmem:[%s1 + $0x340] sm:$0xf]
  %v276 = vld [vmem:[%s1 + $0x344] sm:$0xf]
  %v277 = vld [vmem:[%s1 + $0x348] sm:$0xf]
  %v278 = vld [vmem:[%s1 + $0x34c] sm:$0xf]
  %v279 = vld [vmem:[%s1 + $0x350] sm:$0xf]
  %v280 = vld [vmem:[%s1 + $0x354] sm:$0xf]
  %v281 = vld [vmem:[%s1 + $0x358] sm:$0xf]
  %v282 = vld [vmem:[%s1 + $0x35c] sm:$0xf]
  %v283 = vld [vmem:[%s1 + $0x360] sm:$0xf]
  %v284 = vld [vmem:[%s1 + $0x364] sm:$0xf]
  %v285 = vld [vmem:[%s1 + $0x368] sm:$0xf]
  %v286 = vld [vmem:[%s1 + $0x36c] sm:$0xf]
  %v287 = vld [vmem:[%s1 + $0x370] sm:$0xf]
  %v288 = vld [vmem:[%s1 + $0x374] sm:$0xf]
  %v289 = vld [vmem:[%s1 + $0x378] sm:$0xf]
  %v290 = vld [vmem:[%s1 + $0x37c] sm:$0xf]
  %v291 = vld [vmem:[%s1 + $0x380] sm:$0xf]
  %v292 = vld [vmem:[%s1 + $0x384] sm:$0xf]
  %v293 = vld [vmem:[%s1 + $0x388] sm:$0xf]
  %v294 = vld [vmem:[%s1 + $0x38c] sm:$0xf]
  %v295 = vld [vmem:[%s1 + $0x390] sm:$0xf]
  %v296 = vld [vmem:[%s1 + $0x394] sm:$0xf]
  %v297 = vld [vmem:[%s1 + $0x398] sm:$0xf]
  %v298 = vld [vmem:[%s1 + $0x39c] sm:$0xf]
  %v299 = vld [vmem:[%s1 + $0x3a0] sm:$0xf]
  %v300 = vld [vmem:[%s1 + $0x3a4] sm:$0xf]
  %v301 = vld [vmem:[%s1 + $0x3a8] sm:$0xf]
  %v302 = vld [vmem:[%s1 + $0x3ac] sm:$0xf]
  %v303 = vld [vmem:[%s1 + $0x3b0] sm:$0xf]
  %v304 = vld [vmem:[%s1 + $0x3b4] sm:$0xf]
  %v305 = vld [vmem:[%s1 + $0x3b8] sm:$0xf]
  %v306 = vld [vmem:[%s1 + $0x3bc] sm:$0xf]
  %v307 = vld [vmem:[%s1 + $0x3c0] sm:$0xf]
  %v308 = vld [vmem:[%s1 + $0x3c4] sm:$0xf]
  %v309 = vld [vmem:[%s1 + $0x3c8] sm:$0xf]
  %v310 = vld [vmem:[%s1 + $0x3cc] sm:$0xf]
  %v311 = vld [vmem:[%s1 + $0x3d0] sm:$0xf]
  %v312 = vld [vmem:[%s1 + $0x3d4] sm:$0xf]
  %v313 = vld [vmem:[%s1 + $0x3d8] sm:$0xf]
  %v314 = vld [vmem:[%s1 + $0x3dc] sm:$0xf]
  %v315 = vld [vmem:[%s1 + $0x3e0] sm:$0xf]
  %v316 = vld [vmem:[%s1 + $0x3e4] sm:$0xf]
  %v317 = vld [vmem:[%s1 + $0x3e8] sm:$0xf]
  %v318 = vld [vmem:[%s1 + $0x3ec] sm:$0xf]
  %v319 = vld [vmem:[%s1 + $0x3f0] sm:$0xf]
  %v320 = vld [vmem:[%s1 + $0x3f4] sm:$0xf]
  %v321 = vld [vmem:[%s1 + $0x3f8] sm:$0xf]
  %v322 = vld [vmem:[%s1 + $0x3fc] sm:$0xf]
  %v323 = vld [vmem:[%s2] sm:$0x1]
  %v325 = vperm.slane %v323, 0
  %v583 = vunpack.c.l.b16 %v67
  %v584 = vunpack.c.l.b16 %v68
  %v585 = vunpack.c.l.b16 %v69
  %v586 = vunpack.c.l.b16 %v70
  %v587 = vunpack.c.l.b16 %v71
  %v588 = vunpack.c.l.b16 %v72
  %v589 = vunpack.c.l.b16 %v73
  %v590 = vunpack.c.l.b16 %v74
  %v591 = vunpack.c.l.b16 %v75
  %v592 = vunpack.c.l.b16 %v76
  %v593 = vunpack.c.l.b16 %v77
  %v594 = vunpack.c.l.b16 %v78
  %v595 = vunpack.c.l.b16 %v79
  %v596 = vunpack.c.l.b16 %v80
  %v597 = vunpack.c.l.b16 %v81
  %v598 = vunpack.c.l.b16 %v82
  %v599 = vunpack.c.l.b16 %v83
  %v600 = vunpack.c.l.b16 %v84
  %v601 = vunpack.c.l.b16 %v85
  %v602 = vunpack.c.l.b16 %v86
  %v603 = vunpack.c.l.b16 %v87
  %v604 = vunpack.c.l.b16 %v88
  %v605 = vunpack.c.l.b16 %v89
  %v606 = vunpack.c.l.b16 %v90
  %v607 = vunpack.c.l.b16 %v91
  %v608 = vunpack.c.l.b16 %v92
  %v609 = vunpack.c.l.b16 %v93
  %v610 = vunpack.c.l.b16 %v94
  %v611 = vunpack.c.l.b16 %v95
  %v612 = vunpack.c.l.b16 %v96
  %v613 = vunpack.c.l.b16 %v97
  %v614 = vunpack.c.l.b16 %v98
  %v615 = vunpack.c.l.b16 %v99
  %v616 = vunpack.c.l.b16 %v100
  %v617 = vunpack.c.l.b16 %v101
  %v618 = vunpack.c.l.b16 %v102
  %v619 = vunpack.c.l.b16 %v103
  %v620 = vunpack.c.l.b16 %v104
  %v621 = vunpack.c.l.b16 %v105
  %v622 = vunpack.c.l.b16 %v106
  %v623 = vunpack.c.l.b16 %v107
  %v624 = vunpack.c.l.b16 %v108
  %v625 = vunpack.c.l.b16 %v109
  %v626 = vunpack.c.l.b16 %v110
  %v627 = vunpack.c.l.b16 %v111
  %v628 = vunpack.c.l.b16 %v112
  %v629 = vunpack.c.l.b16 %v113
  %v630 = vunpack.c.l.b16 %v114
  %v631 = vunpack.c.l.b16 %v115
  %v632 = vunpack.c.l.b16 %v116
  %v633 = vunpack.c.l.b16 %v117
  %v634 = vunpack.c.l.b16 %v118
  %v635 = vunpack.c.l.b16 %v119
  %v636 = vunpack.c.l.b16 %v120
  %v637 = vunpack.c.l.b16 %v121
  %v638 = vunpack.c.l.b16 %v122
  %v639 = vunpack.c.l.b16 %v123
  %v640 = vunpack.c.l.b16 %v124
  %v641 = vunpack.c.l.b16 %v125
  %v642 = vunpack.c.l.b16 %v126
  %v643 = vunpack.c.l.b16 %v127
  %v644 = vunpack.c.l.b16 %v128
  %v645 = vunpack.c.l.b16 %v129
  %v646 = vunpack.c.l.b16 %v130
  %v647 = vunpack.c.l.b16 %v131
  %v648 = vunpack.c.l.b16 %v132
  %v649 = vunpack.c.l.b16 %v133
  %v650 = vunpack.c.l.b16 %v134
  %v651 = vunpack.c.l.b16 %v135
  %v652 = vunpack.c.l.b16 %v136
  %v653 = vunpack.c.l.b16 %v137
  %v654 = vunpack.c.l.b16 %v138
  %v655 = vunpack.c.l.b16 %v139
  %v656 = vunpack.c.l.b16 %v140
  %v657 = vunpack.c.l.b16 %v141
  %v658 = vunpack.c.l.b16 %v142
  %v659 = vunpack.c.l.b16 %v143
  %v660 = vunpack.c.l.b16 %v144
  %v661 = vunpack.c.l.b16 %v145
  %v662 = vunpack.c.l.b16 %v146
  %v663 = vunpack.c.l.b16 %v147
  %v664 = vunpack.c.l.b16 %v148
  %v665 = vunpack.c.l.b16 %v149
  %v666 = vunpack.c.l.b16 %v150
  %v667 = vunpack.c.l.b16 %v151
  %v668 = vunpack.c.l.b16 %v152
  %v669 = vunpack.c.l.b16 %v153
  %v670 = vunpack.c.l.b16 %v154
  %v671 = vunpack.c.l.b16 %v155
  %v672 = vunpack.c.l.b16 %v156
  %v673 = vunpack.c.l.b16 %v157
  %v674 = vunpack.c.l.b16 %v158
  %v675 = vunpack.c.l.b16 %v159
  %v676 = vunpack.c.l.b16 %v160
  %v677 = vunpack.c.l.b16 %v161
  %v678 = vunpack.c.l.b16 %v162
  %v679 = vunpack.c.l.b16 %v163
  %v680 = vunpack.c.l.b16 %v164
  %v681 = vunpack.c.l.b16 %v165
  %v682 = vunpack.c.l.b16 %v166
  %v683 = vunpack.c.l.b16 %v167
  %v684 = vunpack.c.l.b16 %v168
  %v685 = vunpack.c.l.b16 %v169
  %v686 = vunpack.c.l.b16 %v170
  %v687 = vunpack.c.l.b16 %v171
  %v688 = vunpack.c.l.b16 %v172
  %v689 = vunpack.c.l.b16 %v173
  %v690 = vunpack.c.l.b16 %v174
  %v691 = vunpack.c.l.b16 %v175
  %v692 = vunpack.c.l.b16 %v176
  %v693 = vunpack.c.l.b16 %v177
  %v694 = vunpack.c.l.b16 %v178
  %v695 = vunpack.c.l.b16 %v179
  %v696 = vunpack.c.l.b16 %v180
  %v697 = vunpack.c.l.b16 %v181
  %v698 = vunpack.c.l.b16 %v182
  %v699 = vunpack.c.l.b16 %v183
  %v700 = vunpack.c.l.b16 %v184
  %v701 = vunpack.c.l.b16 %v185
  %v702 = vunpack.c.l.b16 %v186
  %v703 = vunpack.c.l.b16 %v187
  %v704 = vunpack.c.l.b16 %v188
  %v705 = vunpack.c.l.b16 %v189
  %v706 = vunpack.c.l.b16 %v190
  %v707 = vunpack.c.l.b16 %v191
  %v708 = vunpack.c.l.b16 %v192
  %v709 = vunpack.c.l.b16 %v193
  %v710 = vunpack.c.l.b16 %v194
  %v711 = vunpack.c.l.b16 %v195
  %v712 = vunpack.c.l.b16 %v196
  %v713 = vunpack.c.l.b16 %v197
  %v714 = vunpack.c.l.b16 %v198
  %v715 = vunpack.c.l.b16 %v199
  %v716 = vunpack.c.l.b16 %v200
  %v717 = vunpack.c.l.b16 %v201
  %v718 = vunpack.c.l.b16 %v202
  %v719 = vunpack.c.l.b16 %v203
  %v720 = vunpack.c.l.b16 %v204
  %v721 = vunpack.c.l.b16 %v205
  %v722 = vunpack.c.l.b16 %v206
  %v723 = vunpack.c.l.b16 %v207
  %v724 = vunpack.c.l.b16 %v208
  %v725 = vunpack.c.l.b16 %v209
  %v726 = vunpack.c.l.b16 %v210
  %v727 = vunpack.c.l.b16 %v211
  %v728 = vunpack.c.l.b16 %v212
  %v729 = vunpack.c.l.b16 %v213
  %v730 = vunpack.c.l.b16 %v214
  %v731 = vunpack.c.l.b16 %v215
  %v732 = vunpack.c.l.b16 %v216
  %v733 = vunpack.c.l.b16 %v217
  %v734 = vunpack.c.l.b16 %v218
  %v735 = vunpack.c.l.b16 %v219
  %v736 = vunpack.c.l.b16 %v220
  %v737 = vunpack.c.l.b16 %v221
  %v738 = vunpack.c.l.b16 %v222
  %v739 = vunpack.c.l.b16 %v223
  %v740 = vunpack.c.l.b16 %v224
  %v741 = vunpack.c.l.b16 %v225
  %v742 = vunpack.c.l.b16 %v226
  %v743 = vunpack.c.l.b16 %v227
  %v744 = vunpack.c.l.b16 %v228
  %v745 = vunpack.c.l.b16 %v229
  %v746 = vunpack.c.l.b16 %v230
  %v747 = vunpack.c.l.b16 %v231
  %v748 = vunpack.c.l.b16 %v232
  %v749 = vunpack.c.l.b16 %v233
  %v750 = vunpack.c.l.b16 %v234
  %v751 = vunpack.c.l.b16 %v235
  %v752 = vunpack.c.l.b16 %v236
  %v753 = vunpack.c.l.b16 %v237
  %v754 = vunpack.c.l.b16 %v238
  %v755 = vunpack.c.l.b16 %v239
  %v756 = vunpack.c.l.b16 %v240
  %v757 = vunpack.c.l.b16 %v241
  %v758 = vunpack.c.l.b16 %v242
  %v759 = vunpack.c.l.b16 %v243
  %v760 = vunpack.c.l.b16 %v244
  %v761 = vunpack.c.l.b16 %v245
  %v762 = vunpack.c.l.b16 %v246
  %v763 = vunpack.c.l.b16 %v247
  %v764 = vunpack.c.l.b16 %v248
  %v765 = vunpack.c.l.b16 %v249
  %v766 = vunpack.c.l.b16 %v250
  %v767 = vunpack.c.l.b16 %v251
  %v768 = vunpack.c.l.b16 %v252
  %v769 = vunpack.c.l.b16 %v253
  %v770 = vunpack.c.l.b16 %v254
  %v771 = vunpack.c.l.b16 %v255
  %v772 = vunpack.c.l.b16 %v256
  %v773 = vunpack.c.l.b16 %v257
  %v774 = vunpack.c.l.b16 %v258
  %v775 = vunpack.c.l.b16 %v259
  %v776 = vunpack.c.l.b16 %v260
  %v777 = vunpack.c.l.b16 %v261
  %v778 = vunpack.c.l.b16 %v262
  %v779 = vunpack.c.l.b16 %v263
  %v780 = vunpack.c.l.b16 %v264
  %v781 = vunpack.c.l.b16 %v265
  %v782 = vunpack.c.l.b16 %v266
  %v783 = vunpack.c.l.b16 %v267
  %v784 = vunpack.c.l.b16 %v268
  %v785 = vunpack.c.l.b16 %v269
  %v786 = vunpack.c.l.b16 %v270
  %v787 = vunpack.c.l.b16 %v271
  %v788 = vunpack.c.l.b16 %v272
  %v789 = vunpack.c.l.b16 %v273
  %v790 = vunpack.c.l.b16 %v274
  %v791 = vunpack.c.l.b16 %v275
  %v792 = vunpack.c.l.b16 %v276
  %v793 = vunpack.c.l.b16 %v277
  %v794 = vunpack.c.l.b16 %v278
  %v795 = vunpack.c.l.b16 %v279
  %v796 = vunpack.c.l.b16 %v280
  %v797 = vunpack.c.l.b16 %v281
  %v798 = vunpack.c.l.b16 %v282
  %v799 = vunpack.c.l.b16 %v283
  %v800 = vunpack.c.l.b16 %v284
  %v801 = vunpack.c.l.b16 %v285
  %v802 = vunpack.c.l.b16 %v286
  %v803 = vunpack.c.l.b16 %v287
  %v804 = vunpack.c.l.b16 %v288
  %v805 = vunpack.c.l.b16 %v289
  %v806 = vunpack.c.l.b16 %v290
  %v807 = vunpack.c.l.b16 %v291
  %v808 = vunpack.c.l.b16 %v292
  %v809 = vunpack.c.l.b16 %v293
  %v810 = vunpack.c.l.b16 %v294
  %v811 = vunpack.c.l.b16 %v295
  %v812 = vunpack.c.l.b16 %v296
  %v813 = vunpack.c.l.b16 %v297
  %v814 = vunpack.c.l.b16 %v298
  %v815 = vunpack.c.l.b16 %v299
  %v816 = vunpack.c.l.b16 %v300
  %v817 = vunpack.c.l.b16 %v301
  %v818 = vunpack.c.l.b16 %v302
  %v819 = vunpack.c.l.b16 %v303
  %v820 = vunpack.c.l.b16 %v304
  %v821 = vunpack.c.l.b16 %v305
  %v822 = vunpack.c.l.b16 %v306
  %v823 = vunpack.c.l.b16 %v307
  %v824 = vunpack.c.l.b16 %v308
  %v825 = vunpack.c.l.b16 %v309
  %v826 = vunpack.c.l.b16 %v310
  %v827 = vunpack.c.l.b16 %v311
  %v828 = vunpack.c.l.b16 %v312
  %v829 = vunpack.c.l.b16 %v313
  %v830 = vunpack.c.l.b16 %v314
  %v831 = vunpack.c.l.b16 %v315
  %v832 = vunpack.c.l.b16 %v316
  %v833 = vunpack.c.l.b16 %v317
  %v834 = vunpack.c.l.b16 %v318
  %v835 = vunpack.c.l.b16 %v319
  %v836 = vunpack.c.l.b16 %v320
  %v837 = vunpack.c.l.b16 %v321
  %v838 = vunpack.c.l.b16 %v322
  %v839 = vpack.c.b16 %v584, %v583
  %v840 = vpack.c.b16 %v586, %v585
  %v841 = vpack.c.b16 %v588, %v587
  %v842 = vpack.c.b16 %v590, %v589
  %v843 = vpack.c.b16 %v592, %v591
  %v844 = vpack.c.b16 %v594, %v593
  %v845 = vpack.c.b16 %v596, %v595
  %v846 = vpack.c.b16 %v598, %v597
  %v847 = vpack.c.b16 %v600, %v599
  %v848 = vpack.c.b16 %v602, %v601
  %v849 = vpack.c.b16 %v604, %v603
  %v850 = vpack.c.b16 %v606, %v605
  %v851 = vpack.c.b16 %v608, %v607
  %v852 = vpack.c.b16 %v610, %v609
  %v853 = vpack.c.b16 %v612, %v611
  %v854 = vpack.c.b16 %v614, %v613
  %v855 = vpack.c.b16 %v616, %v615
  %v856 = vpack.c.b16 %v618, %v617
  %v857 = vpack.c.b16 %v620, %v619
  %v858 = vpack.c.b16 %v622, %v621
  %v859 = vpack.c.b16 %v624, %v623
  %v860 = vpack.c.b16 %v626, %v625
  %v861 = vpack.c.b16 %v628, %v627
  %v862 = vpack.c.b16 %v630, %v629
  %v863 = vpack.c.b16 %v632, %v631
  %v864 = vpack.c.b16 %v634, %v633
  %v865 = vpack.c.b16 %v636, %v635
  %v866 = vpack.c.b16 %v638, %v637
  %v867 = vpack.c.b16 %v640, %v639
  %v868 = vpack.c.b16 %v642, %v641
  %v869 = vpack.c.b16 %v644, %v643
  %v870 = vpack.c.b16 %v646, %v645
  %v871 = vpack.c.b16 %v648, %v647
  %v872 = vpack.c.b16 %v650, %v649
  %v873 = vpack.c.b16 %v652, %v651
  %v874 = vpack.c.b16 %v654, %v653
  %v875 = vpack.c.b16 %v656, %v655
  %v876 = vpack.c.b16 %v658, %v657
  %v877 = vpack.c.b16 %v660, %v659
  %v878 = vpack.c.b16 %v662, %v661
  %v879 = vpack.c.b16 %v664, %v663
  %v880 = vpack.c.b16 %v666, %v665
  %v881 = vpack.c.b16 %v668, %v667
  %v882 = vpack.c.b16 %v670, %v669
  %v883 = vpack.c.b16 %v672, %v671
  %v884 = vpack.c.b16 %v674, %v673
  %v885 = vpack.c.b16 %v676, %v675
  %v886 = vpack.c.b16 %v678, %v677
  %v887 = vpack.c.b16 %v680, %v679
  %v888 = vpack.c.b16 %v682, %v681
  %v889 = vpack.c.b16 %v684, %v683
  %v890 = vpack.c.b16 %v686, %v685
  %v891 = vpack.c.b16 %v688, %v687
  %v892 = vpack.c.b16 %v690, %v689
  %v893 = vpack.c.b16 %v692, %v691
  %v894 = vpack.c.b16 %v694, %v693
  %v895 = vpack.c.b16 %v696, %v695
  %v896 = vpack.c.b16 %v698, %v697
  %v897 = vpack.c.b16 %v700, %v699
  %v898 = vpack.c.b16 %v702, %v701
  %v899 = vpack.c.b16 %v704, %v703
  %v900 = vpack.c.b16 %v706, %v705
  %v901 = vpack.c.b16 %v708, %v707
  %v902 = vpack.c.b16 %v710, %v709
  %v903 = vpack.c.b16 %v712, %v711
  %v904 = vpack.c.b16 %v714, %v713
  %v905 = vpack.c.b16 %v716, %v715
  %v906 = vpack.c.b16 %v718, %v717
  %v907 = vpack.c.b16 %v720, %v719
  %v908 = vpack.c.b16 %v722, %v721
  %v909 = vpack.c.b16 %v724, %v723
  %v910 = vpack.c.b16 %v726, %v725
  %v911 = vpack.c.b16 %v728, %v727
  %v912 = vpack.c.b16 %v730, %v729
  %v913 = vpack.c.b16 %v732, %v731
  %v914 = vpack.c.b16 %v734, %v733
  %v915 = vpack.c.b16 %v736, %v735
  %v916 = vpack.c.b16 %v738, %v737
  %v917 = vpack.c.b16 %v740, %v739
  %v918 = vpack.c.b16 %v742, %v741
  %v919 = vpack.c.b16 %v744, %v743
  %v920 = vpack.c.b16 %v746, %v745
  %v921 = vpack.c.b16 %v748, %v747
  %v922 = vpack.c.b16 %v750, %v749
  %v923 = vpack.c.b16 %v752, %v751
  %v924 = vpack.c.b16 %v754, %v753
  %v925 = vpack.c.b16 %v756, %v755
  %v926 = vpack.c.b16 %v758, %v757
  %v927 = vpack.c.b16 %v760, %v759
  %v928 = vpack.c.b16 %v762, %v761
  %v929 = vpack.c.b16 %v764, %v763
  %v930 = vpack.c.b16 %v766, %v765
  %v931 = vpack.c.b16 %v768, %v767
  %v932 = vpack.c.b16 %v770, %v769
  %v933 = vpack.c.b16 %v772, %v771
  %v934 = vpack.c.b16 %v774, %v773
  %v935 = vpack.c.b16 %v776, %v775
  %v936 = vpack.c.b16 %v778, %v777
  %v937 = vpack.c.b16 %v780, %v779
  %v938 = vpack.c.b16 %v782, %v781
  %v939 = vpack.c.b16 %v784, %v783
  %v940 = vpack.c.b16 %v786, %v785
  %v941 = vpack.c.b16 %v788, %v787
  %v942 = vpack.c.b16 %v790, %v789
  %v943 = vpack.c.b16 %v792, %v791
  %v944 = vpack.c.b16 %v794, %v793
  %v945 = vpack.c.b16 %v796, %v795
  %v946 = vpack.c.b16 %v798, %v797
  %v947 = vpack.c.b16 %v800, %v799
  %v948 = vpack.c.b16 %v802, %v801
  %v949 = vpack.c.b16 %v804, %v803
  %v950 = vpack.c.b16 %v806, %v805
  %v951 = vpack.c.b16 %v808, %v807
  %v952 = vpack.c.b16 %v810, %v809
  %v953 = vpack.c.b16 %v812, %v811
  %v954 = vpack.c.b16 %v814, %v813
  %v955 = vpack.c.b16 %v816, %v815
  %v956 = vpack.c.b16 %v818, %v817
  %v957 = vpack.c.b16 %v820, %v819
  %v958 = vpack.c.b16 %v822, %v821
  %v959 = vpack.c.b16 %v824, %v823
  %v960 = vpack.c.b16 %v826, %v825
  %v961 = vpack.c.b16 %v828, %v827
  %v962 = vpack.c.b16 %v830, %v829
  %v963 = vpack.c.b16 %v832, %v831
  %v964 = vpack.c.b16 %v834, %v833
  %v965 = vpack.c.b16 %v836, %v835
  %v966 = vpack.c.b16 %v838, %v837
  %1095 = vmatpush.bf16.msra.mxu0 %v846
  %1096 = vmatpush.bf16.msra.mxu0 %v845
  %1097 = vmatpush.bf16.msra.mxu0 %v844
  %1098 = vmatpush.bf16.msra.mxu0 %v843
  %1099 = vmatpush.bf16.msra.mxu0 %v842
  %1100 = vmatpush.bf16.msra.mxu0 %v841
  %1101 = vmatpush.bf16.msra.mxu0 %v840
  %1102 = vmatpush.bf16.msra.mxu0 %v839
  %1103 = vmatmul.bf16.gmra.mxu0 %v51
  %v1104 = vpop.f32.mrf.mxu0
  %v1105 = vadd.f32 %v325, %v1104
  %v1106 = vpop.f32.mrf.mxu0
  %1107 = vdwg.mxu0
  %1108 = vmatpush.bf16.msra.mxu0 %v854
  %1109 = vmatpush.bf16.msra.mxu0 %v853
  %1110 = vmatpush.bf16.msra.mxu0 %v852
  %1111 = vmatpush.bf16.msra.mxu0 %v851
  %1112 = vmatpush.bf16.msra.mxu0 %v850
  %1113 = vmatpush.bf16.msra.mxu0 %v849
  %1114 = vmatpush.bf16.msra.mxu0 %v848
  %1115 = vmatpush.bf16.msra.mxu0 %v847
  %1116 = vmatmul.bf16.gmra.mxu0 %v52
  %v1117 = vpop.f32.mrf.mxu0
  %v1118 = vadd.f32 %v1105, %v1117
  %v1119 = vpop.f32.mrf.mxu0
  %1120 = vdwg.mxu0
  %1121 = vmatpush.bf16.msra.mxu0 %v862
  %1122 = vmatpush.bf16.msra.mxu0 %v861
  %1123 = vmatpush.bf16.msra.mxu0 %v860
  %1124 = vmatpush.bf16.msra.mxu0 %v859
  %1125 = vmatpush.bf16.msra.mxu0 %v858
  %1126 = vmatpush.bf16.msra.mxu0 %v857
  %1127 = vmatpush.bf16.msra.mxu0 %v856
  %1128 = vmatpush.bf16.msra.mxu0 %v855
  %1129 = vmatmul.bf16.gmra.mxu0 %v53
  %v1130 = vpop.f32.mrf.mxu0
  %v1131 = vadd.f32 %v1118, %v1130
  %v1132 = vpop.f32.mrf.mxu0
  %1133 = vdwg.mxu0
  %1134 = vmatpush.bf16.msra.mxu0 %v870
  %1135 = vmatpush.bf16.msra.mxu0 %v869
  %1136 = vmatpush.bf16.msra.mxu0 %v868
  %1137 = vmatpush.bf16.msra.mxu0 %v867
  %1138 = vmatpush.bf16.msra.mxu0 %v866
  %1139 = vmatpush.bf16.msra.mxu0 %v865
  %1140 = vmatpush.bf16.msra.mxu0 %v864
  %1141 = vmatpush.bf16.msra.mxu0 %v863
  %1142 = vmatmul.bf16.gmra.mxu0 %v54
  %v1143 = vpop.f32.mrf.mxu0
  %v1144 = vadd.f32 %v1131, %v1143
  %v1145 = vpop.f32.mrf.mxu0
  %1146 = vdwg.mxu0
  %1147 = vmatpush.bf16.msra.mxu0 %v878
  %1148 = vmatpush.bf16.msra.mxu0 %v877
  %1149 = vmatpush.bf16.msra.mxu0 %v876
  %1150 = vmatpush.bf16.msra.mxu0 %v875
  %1151 = vmatpush.bf16.msra.mxu0 %v874
  %1152 = vmatpush.bf16.msra.mxu0 %v873
  %1153 = vmatpush.bf16.msra.mxu0 %v872
  %1154 = vmatpush.bf16.msra.mxu0 %v871
  %1155 = vmatmul.bf16.gmra.mxu0 %v55
  %v1156 = vpop.f32.mrf.mxu0
  %v1157 = vadd.f32 %v1144, %v1156
  %v1158 = vpop.f32.mrf.mxu0
  %1159 = vdwg.mxu0
  %1160 = vmatpush.bf16.msra.mxu0 %v886
  %1161 = vmatpush.bf16.msra.mxu0 %v885
  %1162 = vmatpush.bf16.msra.mxu0 %v884
  %1163 = vmatpush.bf16.msra.mxu0 %v883
  %1164 = vmatpush.bf16.msra.mxu0 %v882
  %1165 = vmatpush.bf16.msra.mxu0 %v881
  %1166 = vmatpush.bf16.msra.mxu0 %v880
  %1167 = vmatpush.bf16.msra.mxu0 %v879
  %1168 = vmatmul.bf16.gmra.mxu0 %v56
  %v1169 = vpop.f32.mrf.mxu0
  %v1170 = vadd.f32 %v1157, %v1169
  %v1171 = vpop.f32.mrf.mxu0
  %1172 = vdwg.mxu0
  %1173 = vmatpush.bf16.msra.mxu0 %v894
  %1174 = vmatpush.bf16.msra.mxu0 %v893
  %1175 = vmatpush.bf16.msra.mxu0 %v892
  %1176 = vmatpush.bf16.msra.mxu0 %v891
  %1177 = vmatpush.bf16.msra.mxu0 %v890
  %1178 = vmatpush.bf16.msra.mxu0 %v889
  %1179 = vmatpush.bf16.msra.mxu0 %v888
  %1180 = vmatpush.bf16.msra.mxu0 %v887
  %1181 = vmatmul.bf16.gmra.mxu0 %v57
  %v1182 = vpop.f32.mrf.mxu0
  %v1183 = vadd.f32 %v1170, %v1182
  %v1184 = vpop.f32.mrf.mxu0
  %1185 = vdwg.mxu0
  %1186 = vmatpush.bf16.msra.mxu0 %v902
  %1187 = vmatpush.bf16.msra.mxu0 %v901
  %1188 = vmatpush.bf16.msra.mxu0 %v900
  %1189 = vmatpush.bf16.msra.mxu0 %v899
  %1190 = vmatpush.bf16.msra.mxu0 %v898
  %1191 = vmatpush.bf16.msra.mxu0 %v897
  %1192 = vmatpush.bf16.msra.mxu0 %v896
  %1193 = vmatpush.bf16.msra.mxu0 %v895
  %1194 = vmatmul.bf16.gmra.mxu0 %v58
  %v1195 = vpop.f32.mrf.mxu0
  %v1196 = vadd.f32 %v1183, %v1195
  %v1197 = vpop.f32.mrf.mxu0
  %1198 = vdwg.mxu0
  %1199 = vmatpush.bf16.msra.mxu0 %v910
  %1200 = vmatpush.bf16.msra.mxu0 %v909
  %1201 = vmatpush.bf16.msra.mxu0 %v908
  %1202 = vmatpush.bf16.msra.mxu0 %v907
  %1203 = vmatpush.bf16.msra.mxu0 %v906
  %1204 = vmatpush.bf16.msra.mxu0 %v905
  %1205 = vmatpush.bf16.msra.mxu0 %v904
  %1206 = vmatpush.bf16.msra.mxu0 %v903
  %1207 = vmatmul.bf16.gmra.mxu0 %v59
  %v1208 = vpop.f32.mrf.mxu0
  %v1209 = vadd.f32 %v1196, %v1208
  %v1210 = vpop.f32.mrf.mxu0
  %1211 = vdwg.mxu0
  %1212 = vmatpush.bf16.msra.mxu0 %v918
  %1213 = vmatpush.bf16.msra.mxu0 %v917
  %1214 = vmatpush.bf16.msra.mxu0 %v916
  %1215 = vmatpush.bf16.msra.mxu0 %v915
  %1216 = vmatpush.bf16.msra.mxu0 %v914
  %1217 = vmatpush.bf16.msra.mxu0 %v913
  %1218 = vmatpush.bf16.msra.mxu0 %v912
  %1219 = vmatpush.bf16.msra.mxu0 %v911
  %1220 = vmatmul.bf16.gmra.mxu0 %v60
  %v1221 = vpop.f32.mrf.mxu0
  %v1222 = vadd.f32 %v1209, %v1221
  %v1223 = vpop.f32.mrf.mxu0
  %1224 = vdwg.mxu0
  %1225 = vmatpush.bf16.msra.mxu0 %v926
  %1226 = vmatpush.bf16.msra.mxu0 %v925
  %1227 = vmatpush.bf16.msra.mxu0 %v924
  %1228 = vmatpush.bf16.msra.mxu0 %v923
  %1229 = vmatpush.bf16.msra.mxu0 %v922
  %1230 = vmatpush.bf16.msra.mxu0 %v921
  %1231 = vmatpush.bf16.msra.mxu0 %v920
  %1232 = vmatpush.bf16.msra.mxu0 %v919
  %1233 = vmatmul.bf16.gmra.mxu0 %v61
  %v1234 = vpop.f32.mrf.mxu0
  %v1235 = vadd.f32 %v1222, %v1234
  %v1236 = vpop.f32.mrf.mxu0
  %1237 = vdwg.mxu0
  %1238 = vmatpush.bf16.msra.mxu0 %v934
  %1239 = vmatpush.bf16.msra.mxu0 %v933
  %1240 = vmatpush.bf16.msra.mxu0 %v932
  %1241 = vmatpush.bf16.msra.mxu0 %v931
  %1242 = vmatpush.bf16.msra.mxu0 %v930
  %1243 = vmatpush.bf16.msra.mxu0 %v929
  %1244 = vmatpush.bf16.msra.mxu0 %v928
  %1245 = vmatpush.bf16.msra.mxu0 %v927
  %1246 = vmatmul.bf16.gmra.mxu0 %v62
  %v1247 = vpop.f32.mrf.mxu0
  %v1248 = vadd.f32 %v1235, %v1247
  %v1249 = vpop.f32.mrf.mxu0
  %1250 = vdwg.mxu0
  %1251 = vmatpush.bf16.msra.mxu0 %v942
  %1252 = vmatpush.bf16.msra.mxu0 %v941
  %1253 = vmatpush.bf16.msra.mxu0 %v940
  %1254 = vmatpush.bf16.msra.mxu0 %v939
  %1255 = vmatpush.bf16.msra.mxu0 %v938
  %1256 = vmatpush.bf16.msra.mxu0 %v937
  %1257 = vmatpush.bf16.msra.mxu0 %v936
  %1258 = vmatpush.bf16.msra.mxu0 %v935
  %1259 = vmatmul.bf16.gmra.mxu0 %v63
  %v1260 = vpop.f32.mrf.mxu0
  %v1261 = vadd.f32 %v1248, %v1260
  %v1262 = vpop.f32.mrf.mxu0
  %1263 = vdwg.mxu0
  %1264 = vmatpush.bf16.msra.mxu0 %v950
  %1265 = vmatpush.bf16.msra.mxu0 %v949
  %1266 = vmatpush.bf16.msra.mxu0 %v948
  %1267 = vmatpush.bf16.msra.mxu0 %v947
  %1268 = vmatpush.bf16.msra.mxu0 %v946
  %1269 = vmatpush.bf16.msra.mxu0 %v945
  %1270 = vmatpush.bf16.msra.mxu0 %v944
  %1271 = vmatpush.bf16.msra.mxu0 %v943
  %1272 = vmatmul.bf16.gmra.mxu0 %v64
  %v1273 = vpop.f32.mrf.mxu0
  %v1274 = vadd.f32 %v1261, %v1273
  %v1275 = vpop.f32.mrf.mxu0
  %1276 = vdwg.mxu0
  %1277 = vmatpush.bf16.msra.mxu0 %v958
  %1278 = vmatpush.bf16.msra.mxu0 %v957
  %1279 = vmatpush.bf16.msra.mxu0 %v956
  %1280 = vmatpush.bf16.msra.mxu0 %v955
  %1281 = vmatpush.bf16.msra.mxu0 %v954
  %1282 = vmatpush.bf16.msra.mxu0 %v953
  %1283 = vmatpush.bf16.msra.mxu0 %v952
  %1284 = vmatpush.bf16.msra.mxu0 %v951
  %1285 = vmatmul.bf16.gmra.mxu0 %v65
  %v1286 = vpop.f32.mrf.mxu0
  %v1287 = vadd.f32 %v1274, %v1286
  %v1288 = vpop.f32.mrf.mxu0
  %1289 = vdwg.mxu0
  %1290 = vmatpush.bf16.msra.mxu0 %v966
  %1291 = vmatpush.bf16.msra.mxu0 %v965
  %1292 = vmatpush.bf16.msra.mxu0 %v964
  %1293 = vmatpush.bf16.msra.mxu0 %v963
  %1294 = vmatpush.bf16.msra.mxu0 %v962
  %1295 = vmatpush.bf16.msra.mxu0 %v961
  %1296 = vmatpush.bf16.msra.mxu0 %v960
  %1297 = vmatpush.bf16.msra.mxu0 %v959
  %1298 = vmatmul.bf16.gmra.mxu0 %v66
  %v1299 = vpop.f32.mrf.mxu0
  %v1300 = vadd.f32 %v1287, %v1299
  %v1301 = vpop.f32.mrf.mxu0
  %1302 = vdwg.mxu0
  %vm1303 = vcmp.ge.f32.partialorder %v1300, 0.0
  %v1304 = vmul.f32 %v1300, 0.2
  %v1305 = vsel %vm1303, %v1300, %v1304
  %v1306 = vpack.c.bf16 %v1305, %v1305
  %v1307 = vld [vmem:[%s3] sm:$0xf]
  %v1308 = vld [vmem:[%s3 + $0x4] sm:$0xf]
  %v1309 = vld [vmem:[%s3 + $0x8] sm:$0xf]
  %v1310 = vld [vmem:[%s3 + $0xc] sm:$0xf]
  %v1311 = vld [vmem:[%s4] sm:$0x1]
  %v1313 = vperm.slane %v1311, 0
  %v1319 = vunpack.c.l.b16 %v1307
  %v1320 = vunpack.c.l.b16 %v1308
  %v1321 = vunpack.c.l.b16 %v1309
  %v1322 = vunpack.c.l.b16 %v1310
  %v1323 = vpack.c.b16 %v1320, %v1319
  %v1324 = vpack.c.b16 %v1322, %v1321
  %vm1327 = vcmask 261120
  %v1329 = vsel %vm1327, %v1306, 0
  %1331 = vmatpush.bf16.msra.mxu0 0
  %1332 = vmatpush.bf16.msra.mxu0 0
  %1333 = vmatpush.bf16.msra.mxu0 0
  %1334 = vmatpush.bf16.msra.mxu0 0
  %1335 = vmatpush.bf16.msra.mxu0 0
  %1336 = vmatpush.bf16.msra.mxu0 0
  %1337 = vmatpush.bf16.msra.mxu0 %v1324
  %1338 = vmatpush.bf16.msra.mxu0 %v1323
  %1339 = vmatmul.bf16.gmra.mxu0 %v1329
  %v1340 = vpop.f32.mrf.mxu0
  %v1341 = vadd.f32 %v1313, %v1340
  %v1342 = vpop.f32.mrf.mxu0
  %1343 = vdwg.mxu0
  %vm1344 = vcmp.ge.f32.partialorder %v1341, 0.0
  %v1345 = vmul.f32 %v1341, 0.2
  %v1346 = vsel %vm1344, %v1341, %v1345
  %v1347 = vpack.c.bf16 %v1346, %v1346
  %v1348 = vld [vmem:[%s5] sm:$0xf]
  %v1349 = vld [vmem:[%s5 + $0x4] sm:$0xf]
  %v1350 = vld [vmem:[%s5 + $0x8] sm:$0xf]
  %v1351 = vld [vmem:[%s5 + $0xc] sm:$0xf]
  %v1352 = vld [vmem:[%s6] sm:$0x1]
  %v1354 = vperm.slane %v1352, 0
  %v1360 = vunpack.c.l.b16 %v1348
  %v1361 = vunpack.c.l.b16 %v1349
  %v1362 = vunpack.c.l.b16 %v1350
  %v1363 = vunpack.c.l.b16 %v1351
  %v1364 = vpack.c.b16 %v1361, %v1360
  %v1365 = vpack.c.b16 %v1363, %v1362
  %v1369 = vsel %vm1327, %v1347, 0
  %1371 = vmatpush.bf16.msra.mxu0 0
  %1372 = vmatpush.bf16.msra.mxu0 0
  %1373 = vmatpush.bf16.msra.mxu0 0
  %1374 = vmatpush.bf16.msra.mxu0 0
  %1375 = vmatpush.bf16.msra.mxu0 0
  %1376 = vmatpush.bf16.msra.mxu0 0
  %1377 = vmatpush.bf16.msra.mxu0 %v1365
  %1378 = vmatpush.bf16.msra.mxu0 %v1364
  %1379 = vmatmul.bf16.gmra.mxu0 %v1369
  %v1380 = vpop.f32.mrf.mxu0
  %v1381 = vadd.f32 %v1354, %v1380
  %v1382 = vpop.f32.mrf.mxu0
  %1383 = vdwg.mxu0
  %vm1384 = vcmp.ge.f32.partialorder %v1381, 0.0
  %v1385 = vmul.f32 %v1381, 0.2
  %v1386 = vsel %vm1384, %v1381, %v1385
  %v1387 = vld [vmem:[%s7] sm:$0x1]
  %v1388 = vunpack.c.l.bf16 %v1387
  %v1389 = vperm.slane %v1388, 0
  %v1390 = vmul.f32 %v1386, %v1389
  %vm1391 = vcmask 130048
  %v1392 = vsel %vm1391, %v1390, 0.0
  %1393 = vadd.xlane.f32.xlu0 %v1392
  %v1394 = vpop.xlane.xlu0 %1393
  %v1395 = vld [vmem:[#allocation2] sm:$0x1]
  %v1397 = vperm.slane %v1395, 0
  %v1399 = vadd.f32 %v1394, %v1397
  %v1400 = vsub.f32 0.0, %v1399
  %v1401 = vmul.f32 %v1400, 1.442695
  %v1402 = vpow.pop %v1401
  %v1403 = vadd.f32 %v1402, 1.0
  %v1404 = vrcp.pop %v1403
  %v1405 = vmul.f32 %v1403, %v1404
  %v1406 = vsub.f32 1.0, %v1405
  %v1407 = vmul.f32 %v1404, %v1406
  %v1408 = vadd.f32 %v1404, %v1407
  %vm1409 = vweird.f32 %v1403
  %vm1410 = vweird.f32 %v1404
  %vm1411 = vmor %vm1409, %vm1410
  %v1412 = vsel %vm1411, %v1404, %v1408
  %v1413 = vand.u32 2147483647, %v1403
  %vm1414 = vcmp.eq.f32.partialorder %v1413, 8.507059e+37
  %v1415 = vand.u32 %v1403, 2147483648
  %v1416 = vor.u32 1.1754944e-38, %v1415
  %v1417 = vsel %vm1414, %v1416, %v1412
  %vm1418 = vcmask 7168
  %1419 = vst.msk [vmem:[%s9] sm:$0xff] %vm1418, %v1417
  // Predicated region
  $region38: #{tpu_custom_call.1} parent=0 // pred_check
    _
  $region39: #{tpu_custom_call.1} parent=0 // pred_check_branch
    %1421 = sbr.rel (0) target = $region41
  $region40: #{tpu_custom_call.1} parent=0 // pred_region
    _
  $region41: #{tpu_custom_call.1} parent=0 // pred_fallthru
    _
  // Predicated region
  $region42: #{tpu_custom_call.1} parent=0 // pred_check
    _
  $region43: #{tpu_custom_call.1} parent=0 // pred_check_branch
    %1423 = sbr.rel (0) target = $region45
  $region44: #{tpu_custom_call.1} parent=0 // pred_region
    _
  $region45: #{tpu_custom_call.1} parent=0 // pred_fallthru
    _

</llo_original>
